<compile_context>
chip_gen: v7x
topology: tpu7x:2x2x1
jax: 0.10.0
libtpu: 0.0.40
codegen_flags: <defaults>
</compile_context>

<pallas_src>
import functools

import jax
import jax.numpy as jnp
from jax import lax  # noqa: F401  (kept for optional precision overrides)
from jax.experimental import pallas as pl
from jax.experimental.pallas import tpu as pltpu


def _round_up(x, m):
    return ((x + m - 1) // m) * m


def _pick_tile(total, target, unit):
    """Largest multiple of `unit` that divides `total` and is <= target (>= unit)."""
    best = unit
    t = unit
    limit = min(total, target)
    while t <= limit:
        if total % t == 0:
            best = t
        t += unit
    return best


# --------------------------- small (grid-free) path -------------------------

def _small_linear_kernel(x_ref, wt_ref, b_ref, o_ref):
    # Whole arrays resident in VMEM: x (Mp, Dp), W^T (Dp, Np), b (1, Np).
    acc = jnp.dot(x_ref[...], wt_ref[...], preferred_element_type=jnp.float32)
    o_ref[...] = (acc + b_ref[...].astype(jnp.float32)).astype(o_ref.dtype)


# --------------------------- tiled path --------------------------------------

def _linear_kernel(x_ref, wt_ref, b_ref, o_ref):
    # x_ref:  (tm, tk)  activations (compute dtype, bf16 by default)
    # wt_ref: (tk, tn)  W^T tile (compute dtype) — MXU-native layout
    # b_ref:  (1,  tn)  bias tile (f32)
    # o_ref:  (tm, tn)  f32 output tile; its index_map ignores k, so the same
    #                   VMEM buffer persists across the K axis and serves as
    #                   the accumulator (no scratch, no finalize copy pass).
    k = pl.program_id(2)

    @pl.when(k == 0)
    def _init():
        # Fold the bias add into accumulator init (one fewer VPU pass).
        o_ref[...] = jnp.broadcast_to(b_ref[...].astype(o_ref.dtype), o_ref.shape)

    o_ref[...] += jnp.dot(
        x_ref[...], wt_ref[...], preferred_element_type=jnp.float32
    )


_SMALL_BYTES = 2 << 20  # whole-problem-in-VMEM threshold (f32 footprint)


@functools.partial(jax.jit, static_argnames=("compute_dtype",))
def classifier_forward(x, w, b, *, compute_dtype=jnp.bfloat16):
    """nn.Linear forward: y = x @ w.T + b.

    x: [B, D]; w: [n_way, D] (PyTorch layout); b: [n_way]  ->  [B, n_way].
    """
    B, D = x.shape
    n_way = w.shape[0]
    out_dtype = x.dtype

    total_bytes = 4 * (B * D + n_way * D + n_way + B * n_way)
    if total_bytes <= _SMALL_BYTES:
        # Latency-dominated regime (typical few-shot head). Single grid-free
        # call, f32 throughout (module-exact numerics), alignment-only padding.
        Mp = _round_up(B, 8)
        Np = _round_up(n_way, 128)
        Dp = _round_up(D, 128)
        x_p = jnp.pad(x, ((0, Mp - B), (0, Dp - D)))
        wt_p = jnp.pad(w, ((0, Np - n_way), (0, Dp - D))).T          # (Dp, Np)
        b_p = jnp.pad(b, (0, Np - n_way)).reshape(1, Np)
        out_p = pl.pallas_call(
            _small_linear_kernel,
            out_shape=jax.ShapeDtypeStruct((Mp, Np), out_dtype),
        )(x_p, wt_p, b_p)
        return out_p[:B, :n_way]

    # ---------------- tiled path ----------------
    cdt = jnp.dtype(compute_dtype)
    sub = 16 if cdt.itemsize == 2 else 8  # sublane granularity for 2nd-minor dim

    # Alignment-only padding (no round-up to tile multiples).
    Mp = _round_up(B, sub)
    Np = _round_up(n_way, 128)
    Dp = _round_up(D, 128)

    # Tiles are divisors of the padded extents. tm = padded batch when it fits
    # (single M block -> W streamed from HBM exactly once); tn/tk grow toward
    # 512/1024 (256-multiples preferred for the v6e/v7x 2x256^2 MXU).
    tm = _pick_tile(Mp, 1024, sub)
    tn = _pick_tile(Np, 512, 128)
    tk = _pick_tile(Dp, 1024, 128)
    # v7x has 2 TensorCores sharded over "parallel" grid axes: keep >= 2 blocks
    # along N when M collapsed to a single block.
    if Mp // tm == 1 and Np // tn == 1 and Np >= 256:
        tn = _pick_tile(Np, Np // 2, 128)

    # Pad + cast (+ one-time W transpose) fused in the wrapper; padded
    # rows/cols are zero and contribute nothing to the contraction.
    x_p = jnp.pad(x, ((0, Mp - B), (0, Dp - D))).astype(compute_dtype)
    wt_p = jnp.pad(w, ((0, Np - n_way), (0, Dp - D))).astype(compute_dtype).T  # (Dp, Np)
    b_p = jnp.pad(b, (0, Np - n_way)).astype(jnp.float32).reshape(1, Np)

    grid = (Mp // tm, Np // tn, Dp // tk)
    cb = cdt.itemsize
    cost = pl.CostEstimate(
        flops=2 * Mp * Dp * Np,
        transcendentals=0,
        # Real traffic: x re-read once per N block, W re-read once per M block.
        bytes_accessed=(
            Mp * Dp * cb * (Np // tn)
            + Np * Dp * cb * (Mp // tm)
            + Np * 4 * (Mp // tm)
            + Mp * Np * 4
        ),
    )

    out_p = pl.pallas_call(
        _linear_kernel,
        out_shape=jax.ShapeDtypeStruct((Mp, Np), jnp.float32),
        grid_spec=pltpu.PrefetchScalarGridSpec(
            num_scalar_prefetch=0,
            grid=grid,
            in_specs=[
                pl.BlockSpec((tm, tk), lambda i, j, k: (i, k)),   # x tile
                pl.BlockSpec((tk, tn), lambda i, j, k: (k, j)),   # W^T tile
                pl.BlockSpec((1, tn), lambda i, j, k: (0, j)),    # bias tile
            ],
            out_specs=pl.BlockSpec((tm, tn), lambda i, j, k: (i, j)),
        ),
        compiler_params=pltpu.CompilerParams(
            dimension_semantics=("parallel", "parallel", "arbitrary"),
            vmem_limit_bytes=32 * 1024 * 1024,
        ),
        cost_estimate=cost,
    )(x_p, wt_p, b_p)

    out = out_p[:B, :n_way]
    return out.astype(out_dtype)


if __name__ == "__main__":
    key = jax.random.PRNGKey(0)

    # --- tiny shapes implied by the module (few-shot head): dim=32, n_way=8 ---
    B, dim, n_way = 8, 32, 8
    kx, kw, kb, knext = jax.random.split(key, 4)
    bound = 1.0 / jnp.sqrt(jnp.float32(dim))
    w = jax.random.uniform(kw, (n_way, dim), jnp.float32, -bound, bound)
    b = jax.random.uniform(kb, (n_way,), jnp.float32, -bound, bound)
    x = jax.random.normal(kx, (B, dim), jnp.float32)

    out = classifier_forward(x, w, b)
    jax.block_until_ready(out)
    ref = x @ w.T + b
    assert out.shape == (B, n_way)
    assert jnp.allclose(out, ref, atol=1e-4, rtol=1e-4)

    # --- medium shapes to exercise the tiled bf16 path (padding + multi-N grid) ---
    B2, dim2, n_way2 = 100, 1000, 520
    kx2, kw2, kb2 = jax.random.split(knext, 3)
    bound2 = 1.0 / jnp.sqrt(jnp.float32(dim2))
    w2 = jax.random.uniform(kw2, (n_way2, dim2), jnp.float32, -bound2, bound2)
    b2 = jax.random.uniform(kb2, (n_way2,), jnp.float32, -bound2, bound2)
    x2 = jax.random.normal(kx2, (B2, dim2), jnp.float32)

    out2 = classifier_forward(x2, w2, b2)   # bf16 operands, f32 accumulation
    jax.block_until_ready(out2)
    ref2 = x2 @ w2.T + b2
    assert out2.shape == (B2, n_way2)
    max_err = jnp.max(jnp.abs(out2 - ref2))
    assert max_err < 5e-2, max_err

    print("KERNEL_OK")
</pallas_src>

<mosaic_0001>
module attributes {stable_mosaic.version = 11 : i64} {
  func.func @_small_linear_kernel(%arg0: memref<8x128xf32, #tpu.memory_space<vmem>>, %arg1: memref<128x128xf32, #tpu.memory_space<vmem>>, %arg2: memref<1x128xf32, #tpu.memory_space<vmem>>, %arg3: memref<8x128xf32, #tpu.memory_space<vmem>>) attributes {dimension_semantics = [], scalar_prefetch = 0 : i64, scratch_operands = 0 : i64, tpu.core_type = #tpu.core_type<tc>} {
    %c0 = arith.constant 0 : index
    %c0_0 = arith.constant 0 : index
    %0 = vector.load %arg0[%c0, %c0_0] : memref<8x128xf32, #tpu.memory_space<vmem>>, vector<8x128xf32>
    %c0_1 = arith.constant 0 : index
    %c0_2 = arith.constant 0 : index
    %1 = vector.load %arg1[%c0_1, %c0_2] : memref<128x128xf32, #tpu.memory_space<vmem>>, vector<128x128xf32>
    %cst = arith.constant dense<0.000000e+00> : vector<8x128xf32>
    %2 = tpu.matmul %0, %1, %cst {dimension_numbers = #tpu.dot_dimension_numbers<[1], [0], [0], [1], [0, 0, 1, 1], [], []>} : vector<8x128xf32>, vector<128x128xf32>, vector<8x128xf32> -> vector<8x128xf32>
    %c0_3 = arith.constant 0 : index
    %c0_4 = arith.constant 0 : index
    %3 = vector.load %arg2[%c0_3, %c0_4] : memref<1x128xf32, #tpu.memory_space<vmem>>, vector<1x128xf32>
    %4 = vector.broadcast %3 : vector<1x128xf32> to vector<8x128xf32>
    %5 = arith.addf %2, %4 : vector<8x128xf32>
    %c0_5 = arith.constant 0 : index
    %c0_6 = arith.constant 0 : index
    %6 = vector.load %arg3[%c0_5, %c0_6] : memref<8x128xf32, #tpu.memory_space<vmem>>, vector<8x128xf32>
    tpu.vector_store %arg3[%c0_5, %c0_6], %5 {strides = array<i32>} : memref<8x128xf32, #tpu.memory_space<vmem>>, vector<8x128xf32>,
    return
  }
}

</mosaic_0001>

<llo_original>
// kernel: classifier_forward.1
$region0: #{classifier_forward.1}
  #allocation0 [shape = 'u32[]', space=smem, size = 0x4, offset = 0x4, fixed_abs, tag = 'smem constant byte address 0x4 - core index']
  #allocation1 [shape = 'u32[144,128]{1,0:T(1,128)}', space=vmem, size = 0x12000, scoped, tag = 'internal scratch']
  %s0 = inlined_call_operand.vmem [shape: f32[8,128], index: 0, kind: input, shape index: {}]
  %s1 = inlined_call_operand.vmem [shape: f32[128,128], index: 1, kind: input, shape index: {}]
  %s2 = inlined_call_operand.vmem [shape: f32[1,128], index: 2, kind: input, shape index: {}]
  %s3 = inlined_call_operand.hbm [shape: f32[8,128], index: 3, kind: output, shape index: {}]
  %s4 = sld [smem:[#allocation0]]
  $region22: #{classifier_forward.1} parent=0
    _
  %s6 = ssub.s32 1, %s4
  %s7 = scalar_select 0, %s6, %s4
  $region1: #{classifier_forward.1} parent=0
    #allocation2 [shape = 'u8[4096]{0}', space=vmem, size = 0x1000, scoped, tag = 'output window, operand 0, single buffered']
    #allocation3 [shape = 's32[1]{0}', space=sflag, size = 0x4, scoped, tag = 'scoped memory for classifier_forward.1']
    %8 = vsyncpa [#allocation3], 0
    // Predicated region
    $region2: #{classifier_forward.1} parent=1 // pred_check
      _
    $region3: #{classifier_forward.1} parent=1 // pred_check_branch
      %10 = sbr.rel (0) target = $region5
    $region4: #{classifier_forward.1} parent=1 // pred_region
      _
    $region5: #{classifier_forward.1} parent=1 // pred_fallthru
      _
    // Predicated region
    $region6: #{classifier_forward.1} parent=1 // pred_check
      _
    $region7: #{classifier_forward.1} parent=1 // pred_check_branch
      %12 = sbr.rel (0) target = $region9
    $region8: #{classifier_forward.1} parent=1 // pred_region
      _
    $region9: #{classifier_forward.1} parent=1 // pred_fallthru
      _
    // Predicated region
    $region10: #{classifier_forward.1} parent=1 // pred_check
      _
    $region11: #{classifier_forward.1} parent=1 // pred_check_branch
      %14 = sbr.rel (0) target = $region13
    $region12: #{classifier_forward.1} parent=1 // pred_region
      _
    $region13: #{classifier_forward.1} parent=1 // pred_fallthru
      _
    %v15 = vld [vmem:[%s0] sm:$0xff]
    %v16 = vld [vmem:[%s1] sm:$0xff]
    %v17 = vld [vmem:[%s1 + $0x8] sm:$0xff]
    %v18 = vld [vmem:[%s1 + $0x10] sm:$0xff]
    %v19 = vld [vmem:[%s1 + $0x18] sm:$0xff]
    %v20 = vld [vmem:[%s1 + $0x20] sm:$0xff]
    %v21 = vld [vmem:[%s1 + $0x28] sm:$0xff]
    %v22 = vld [vmem:[%s1 + $0x30] sm:$0xff]
    %v23 = vld [vmem:[%s1 + $0x38] sm:$0xff]
    %v24 = vld [vmem:[%s1 + $0x40] sm:$0xff]
    %v25 = vld [vmem:[%s1 + $0x48] sm:$0xff]
    %v26 = vld [vmem:[%s1 + $0x50] sm:$0xff]
    %v27 = vld [vmem:[%s1 + $0x58] sm:$0xff]
    %v28 = vld [vmem:[%s1 + $0x60] sm:$0xff]
    %v29 = vld [vmem:[%s1 + $0x68] sm:$0xff]
    %v30 = vld [vmem:[%s1 + $0x70] sm:$0xff]
    %v31 = vld [vmem:[%s1 + $0x78] sm:$0xff]
    %v32 = vld [vmem:[%s2] sm:$0x1]
    %v34 = vlaneseq
    %v35 = vshrl.u32 %v34, 7
    %v36 = vsub.s32 0, %v35
    %v37 = vrot.slane %v32, %v36
    %39 = vmatprep.subr.mxu0 0.0
    %40 = vmatpush1.msra.mxu0 %v16
    %41 = vmatprep.subr.mxu0 0.0
    %42 = vmatpush1.msra.mxu0 %v17
    %43 = vmatprep.subr.mxu0 0.0
    %44 = vmatpush1.msra.mxu0 %v18
    %45 = vmatprep.subr.mxu0 0.0
    %46 = vmatpush1.msra.mxu0 %v19
    %47 = vmatprep.subr.mxu0 0.0
    %48 = vmatpush1.msra.mxu0 %v20
    %49 = vmatprep.subr.mxu0 0.0
    %50 = vmatpush1.msra.mxu0 %v21
    %51 = vmatprep.subr.mxu0 0.0
    %52 = vmatpush1.msra.mxu0 %v22
    %53 = vmatprep.subr.mxu0 0.0
    %54 = vmatpush1.msra.mxu0 %v23
    %55 = vmatprep.subr.mxu0 0.0
    %56 = vmatpush1.msra.mxu0 %v24
    %57 = vmatprep.subr.mxu0 0.0
    %58 = vmatpush1.msra.mxu0 %v25
    %59 = vmatprep.subr.mxu0 0.0
    %60 = vmatpush1.msra.mxu0 %v26
    %61 = vmatprep.subr.mxu0 0.0
    %62 = vmatpush1.msra.mxu0 %v27
    %63 = vmatprep.subr.mxu0 0.0
    %64 = vmatpush1.msra.mxu0 %v28
    %65 = vmatprep.subr.mxu0 0.0
    %66 = vmatpush1.msra.mxu0 %v29
    %67 = vmatprep.subr.mxu0 0.0
    %68 = vmatpush1.msra.mxu0 %v30
    %69 = vmatprep.subr.mxu0 0.0
    %70 = vmatpush1.msra.mxu0 %v31
    %71 = vmatprep.subr.mxu0 0.0
    %72 = vmatpush1.msra.mxu0 0.0
    %73 = vmatprep.subr.mxu0 0.0
    %74 = vmatpush1.msra.mxu0 0.0
    %75 = vmatprep.subr.mxu0 0.0
    %76 = vmatpush1.msra.mxu0 0.0
    %77 = vmatprep.subr.mxu0 0.0
    %78 = vmatpush1.msra.mxu0 0.0
    %79 = vmatprep.subr.mxu0 0.0
    %80 = vmatpush1.msra.mxu0 0.0
    %81 = vmatprep.subr.mxu0 0.0
    %82 = vmatpush1.msra.mxu0 0.0
    %83 = vmatprep.subr.mxu0 0.0
    %84 = vmatpush1.msra.mxu0 0.0
    %85 = vmatprep.subr.mxu0 0.0
    %86 = vmatpush1.msra.mxu0 0.0
    %87 = vmatprep.subr.mxu0 0.0
    %88 = vmatpush1.msra.mxu0 0.0
    %89 = vmatprep.subr.mxu0 0.0
    %90 = vmatpush1.msra.mxu0 0.0
    %91 = vmatprep.subr.mxu0 0.0
    %92 = vmatpush1.msra.mxu0 0.0
    %93 = vmatprep.subr.mxu0 0.0
    %94 = vmatpush1.msra.mxu0 0.0
    %95 = vmatprep.subr.mxu0 0.0
    %96 = vmatpush1.msra.mxu0 0.0
    %97 = vmatprep.subr.mxu0 0.0
    %98 = vmatpush1.msra.mxu0 0.0
    %99 = vmatprep.subr.mxu0 0.0
    %100 = vmatpush1.msra.mxu0 0.0
    %101 = vmatprep.subr.mxu0 0.0
    %102 = vmatpush1.msra.mxu0 0.0
    %103 = vmatprep.mubr.f32.mxu0 0.0
    %104 = vmatmul.mubr.f32.gmra.mrb[0].mxu0 %v15
    %v105 = vpop.f32.mrb[0].mxu0
    %v106 = vadd.f32 %v37, %v105
    %v107 = vpop.f32.mrb[0].mxu0
    %108 = vdwg.mxu0
    %109 = vst [vmem:[#allocation2] sm:$0xff] %v106
    // Predicated region
    $region14: #{classifier_forward.1} parent=1 // pred_check
      _
    $region15: #{classifier_forward.1} parent=1 // pred_check_branch
      %111 = sbr.rel (0) target = $region17
    $region16: #{classifier_forward.1} parent=1 // pred_region
      %s113 = ssub.s32 128, 128
      %114 = vsyncadd [#allocation3], %s113
      %s116 = sshll.u32 [#allocation2], 4
      %s117 = int_to_ptr.vmem [resolvable:$true] %s116
      %119 = dma.vmem_to_hbm [thread:$0]  %s117, 128, %s3, [#allocation3]
    $region17: #{classifier_forward.1} parent=1 // pred_fallthru
      _
    // Predicated region
    $region18: #{classifier_forward.1} parent=1 // pred_check
      _
    $region19: #{classifier_forward.1} parent=1 // pred_check_branch
      %121 = sbr.rel (0) target = $region21
    $region20: #{classifier_forward.1} parent=1 // pred_region
      %122 = dma.done [#allocation3], 128
    $region21: #{classifier_forward.1} parent=1 // pred_fallthru
      _
    %123 = vsyncpa [#allocation3], 1

</llo_original>
